<compile_context>
chip_gen: v7x
topology: tpu7x:2x2x1
jax: 0.10.0
libtpu: 0.0.40
codegen_flags: <defaults>
</compile_context>

<pallas_src>
import functools

import jax
import jax.numpy as jnp
from jax.experimental import pallas as pl
from jax.experimental.pallas import tpu as pltpu


def _instance_norm_kernel(x_ref, gb_ref, o_ref, *, eps, hw):
    # x_ref: (TM, HW_pad) tile of rows; gb_ref: (TM, 2) per-row (gamma, beta).
    x = x_ref[...].astype(jnp.float32)

    # One traversal: sum and sum-of-squares (zero-padded lanes add nothing).
    s1 = jnp.sum(x, axis=1, keepdims=True)
    s2 = jnp.sum(x * x, axis=1, keepdims=True)

    mean = s1 * jnp.float32(1.0 / hw)
    # Unbiased variance (divide by HW - 1), matching torch.var() in the module.
    var = (s2 - s1 * mean) / jnp.float32(hw - 1)
    inv = jax.lax.rsqrt(var + jnp.float32(eps))

    g = gb_ref[:, 0:1]                    # (TM, 1)
    b = gb_ref[:, 1:2]                    # (TM, 1)
    scale = inv * g                       # (TM, 1)
    shift = b - mean * scale              # (TM, 1)

    o_ref[...] = (x * scale + shift).astype(o_ref.dtype)


def _choose_tm(nc, hw_pad):
    # ~2 MiB (f32) per block: double-buffered in + out plus in-kernel f32 temps
    # stay comfortably inside every generation's VMEM (v5e 16 MiB default
    # scoped limit, v7x 64 MiB physical) once vmem_limit_bytes is raised.
    row_bytes = hw_pad * 4
    budget = 2 * 1024 * 1024
    tm = (budget // max(row_bytes, 1)) // 8 * 8
    tm = max(8, min(tm, 1024))
    rows8 = ((nc + 7) // 8) * 8
    tm = min(tm, rows8)
    # Prefer >= 2 grid steps so v7x's two TensorCores both get work.
    while tm > 8 and (nc + tm - 1) // tm < 2:
        tm = max(8, ((tm // 2) + 7) // 8 * 8)
    return tm


def instance_norm(x, gamma, beta, *, eps=1e-5, affine=True):
    """x: (N, C, H, W); gamma/beta: (1, C, 1, 1). Returns same shape/dtype as x."""
    N, C, H, W = x.shape
    HW = H * W
    NC = N * C

    x2d = x.reshape(NC, HW)

    # Lane-dense last dim: pad HW to a multiple of 128 with zeros (they do not
    # perturb sum / sum-of-squares; the kernel divides by the true HW).
    HW_pad = ((HW + 127) // 128) * 128
    if HW_pad != HW:
        x2d = jnp.pad(x2d, ((0, 0), (0, HW_pad - HW)))

    # Per-row (gamma, beta) packed into a single (NC, 2) f32 operand.
    if affine:
        g_rows = jnp.broadcast_to(gamma.reshape(1, C), (N, C)).reshape(NC)
        b_rows = jnp.broadcast_to(beta.reshape(1, C), (N, C)).reshape(NC)
    else:
        g_rows = jnp.ones((NC,), dtype=jnp.float32)
        b_rows = jnp.zeros((NC,), dtype=jnp.float32)
    gb = jnp.stack(
        [g_rows.astype(jnp.float32), b_rows.astype(jnp.float32)], axis=1
    )

    # TODO(synk): for very large spatial sizes (HW*4B per row >~ 1 MiB) add an
    # HW grid axis with sum/sumsq scratch + a second normalization pass instead
    # of loading the whole spatial extent of each row into one VMEM block.
    TM = _choose_tm(NC, HW_pad)
    grid = (pl.cdiv(NC, TM),)

    kernel = functools.partial(_instance_norm_kernel, eps=float(eps), hw=HW)

    out2d = pl.pallas_call(
        kernel,
        out_shape=jax.ShapeDtypeStruct((NC, HW_pad), x.dtype),
        grid_spec=pltpu.PrefetchScalarGridSpec(
            num_scalar_prefetch=0,
            grid=grid,
            in_specs=[
                pl.BlockSpec((TM, HW_pad), lambda i: (i, 0)),
                pl.BlockSpec((TM, 2), lambda i: (i, 0)),
            ],
            out_specs=pl.BlockSpec((TM, HW_pad), lambda i: (i, 0)),
        ),
        compiler_params=pltpu.CompilerParams(
            dimension_semantics=("parallel",),
            vmem_limit_bytes=48 * 1024 * 1024,
        ),
    )(x2d, gb)

    if HW_pad != HW:
        out2d = out2d[:, :HW]
    return out2d.reshape(N, C, H, W)


def _reference(x, gamma, beta, eps=1e-5, affine=True):
    dims = (2, 3)
    mean = jnp.mean(x, axis=dims, keepdims=True)
    hw = x.shape[2] * x.shape[3]
    # Unbiased variance, matching torch.var() used by the module's forward.
    var = jnp.sum((x - mean) ** 2, axis=dims, keepdims=True) / (hw - 1)
    y = (x - mean) / jnp.sqrt(var + eps)
    if affine:
        y = y * gamma + beta
    return y


if __name__ == "__main__":
    # Primary shape: N=2, C=4, 16x16 (deterministic params per module __init__).
    key = jax.random.PRNGKey(0)
    N, C, H, W = 2, 4, 16, 16
    x = jax.random.normal(key, (N, C, H, W), dtype=jnp.float32)
    gamma = jnp.ones((1, C, 1, 1), dtype=jnp.float32)   # nn.init.ones_
    beta = jnp.zeros((1, C, 1, 1), dtype=jnp.float32)   # nn.init.zeros_

    out = jax.block_until_ready(instance_norm(x, gamma, beta, eps=1e-5, affine=True))
    ref = _reference(x, gamma, beta, eps=1e-5)
    assert out.shape == x.shape and out.dtype == x.dtype
    assert jnp.allclose(out, ref, atol=1e-4, rtol=1e-4), "mismatch vs reference"

    # Secondary shape exercising ragged rows (NC % 8 != 0), HW padding
    # (HW % 128 != 0), and a non-trivial affine.
    N2, C2, H2, W2 = 2, 3, 7, 7
    k1, k2, k3 = jax.random.split(jax.random.PRNGKey(1), 3)
    x2 = jax.random.normal(k1, (N2, C2, H2, W2), dtype=jnp.float32)
    g2 = jax.random.normal(k2, (1, C2, 1, 1), dtype=jnp.float32)
    b2 = jax.random.normal(k3, (1, C2, 1, 1), dtype=jnp.float32)
    out2 = jax.block_until_ready(instance_norm(x2, g2, b2, eps=1e-5, affine=True))
    ref2 = _reference(x2, g2, b2, eps=1e-5)
    assert jnp.allclose(out2, ref2, atol=1e-4, rtol=1e-4), "mismatch vs reference (ragged)"

    print("KERNEL_OK")
</pallas_src>

<mosaic_0001>
module attributes {stable_mosaic.version = 11 : i64} {
  func.func @_instance_norm_kernel(%arg0: i32, %arg1: memref<8x256xf32, #tpu.memory_space<vmem>>, %arg2: memref<8x2xf32, #tpu.memory_space<vmem>>, %arg3: memref<8x256xf32, #tpu.memory_space<vmem>>) attributes {dimension_semantics = [#tpu.dimension_semantics<parallel>], iteration_bounds = array<i64: 1>, scalar_prefetch = 0 : i64, scratch_operands = 0 : i64, tpu.core_type = #tpu.core_type<tc>, window_params = [{transform_indices = @transform_0, window_bounds = array<i64: 8, 256>}, {transform_indices = @transform_1, window_bounds = array<i64: 8, 2>}, {transform_indices = @transform_2, window_bounds = array<i64: 8, 256>}]} {
    %c0 = arith.constant 0 : index
    %c0_0 = arith.constant 0 : index
    %0 = vector.load %arg1[%c0, %c0_0] : memref<8x256xf32, #tpu.memory_space<vmem>>, vector<8x256xf32>
    %cst = arith.constant dense<0.000000e+00> : vector<8xf32>
    %1 = vector.multi_reduction <add>, %0, %cst [1] : vector<8x256xf32> to vector<8xf32>
    %2 = vector.shape_cast %1 : vector<8xf32> to vector<8x1xf32>
    %3 = arith.mulf %0, %0 : vector<8x256xf32>
    %cst_1 = arith.constant dense<0.000000e+00> : vector<8xf32>
    %4 = vector.multi_reduction <add>, %3, %cst_1 [1] : vector<8x256xf32> to vector<8xf32>
    %5 = vector.shape_cast %4 : vector<8xf32> to vector<8x1xf32>
    %cst_2 = arith.constant 3.906250e-03 : f32
    %6 = vector.broadcast %cst_2 : f32 to vector<8x1xf32>
    %7 = arith.mulf %2, %6 : vector<8x1xf32>
    %8 = arith.mulf %2, %7 : vector<8x1xf32>
    %9 = arith.subf %5, %8 : vector<8x1xf32>
    %cst_3 = arith.constant 2.550000e+02 : f32
    %10 = vector.broadcast %cst_3 : f32 to vector<8x1xf32>
    %11 = arith.divf %9, %10 : vector<8x1xf32>
    %cst_4 = arith.constant 9.99999974E-6 : f32
    %12 = vector.broadcast %cst_4 : f32 to vector<8x1xf32>
    %13 = arith.addf %11, %12 : vector<8x1xf32>
    %14 = math.rsqrt %13 : vector<8x1xf32>
    %c0_5 = arith.constant 0 : index
    %c0_6 = arith.constant 0 : index
    %15 = vector.load %arg2[%c0_5, %c0_6] : memref<8x2xf32, #tpu.memory_space<vmem>>, vector<8x1xf32>
    %c0_7 = arith.constant 0 : index
    %c1 = arith.constant 1 : index
    %16 = vector.load %arg2[%c0_7, %c1] : memref<8x2xf32, #tpu.memory_space<vmem>>, vector<8x1xf32>
    %17 = arith.mulf %14, %15 : vector<8x1xf32>
    %18 = arith.mulf %7, %17 : vector<8x1xf32>
    %19 = arith.subf %16, %18 : vector<8x1xf32>
    %20 = vector.broadcast %17 : vector<8x1xf32> to vector<8x256xf32>
    %21 = arith.mulf %0, %20 : vector<8x256xf32>
    %22 = vector.broadcast %19 : vector<8x1xf32> to vector<8x256xf32>
    %23 = arith.addf %21, %22 : vector<8x256xf32>
    %c0_8 = arith.constant 0 : index
    %c0_9 = arith.constant 0 : index
    %24 = vector.load %arg3[%c0_8, %c0_9] : memref<8x256xf32, #tpu.memory_space<vmem>>, vector<8x256xf32>
    tpu.vector_store %arg3[%c0_8, %c0_9], %23 {strides = array<i32>} : memref<8x256xf32, #tpu.memory_space<vmem>>, vector<8x256xf32>,
    return
  }
  func.func @transform_0(%arg0: i32) -> (i32, i32) {
    %c0_i32 = arith.constant 0 : i32
    %c0_i32_0 = arith.constant 0 : i32
    return %arg0, %c0_i32 : i32, i32
  }
  func.func @transform_1(%arg0: i32) -> (i32, i32) {
    %c0_i32 = arith.constant 0 : i32
    %c0_i32_0 = arith.constant 0 : i32
    return %arg0, %c0_i32 : i32, i32
  }
  func.func @transform_2(%arg0: i32) -> (i32, i32) {
    %c0_i32 = arith.constant 0 : i32
    %c0_i32_0 = arith.constant 0 : i32
    return %arg0, %c0_i32 : i32, i32
  }
}

</mosaic_0001>

<llo_original>
// kernel: tpu_custom_call.1
$region0: #{tpu_custom_call.1}
  #allocation0 [shape = 'u32[]', space=smem, size = 0x4, offset = 0x4, fixed_abs, tag = 'smem constant byte address 0x4 - core index']
  #allocation1 [shape = 'u32[144,128]{1,0:T(1,128)}', space=vmem, size = 0x12000, scoped, tag = 'internal scratch']
  %s0 = inlined_call_operand.hbm [shape: f32[8,256], index: 0, kind: input, shape index: {}]
  %s1 = inlined_call_operand.vmem [shape: f32[8,2], index: 1, kind: input, shape index: {}]
  %s2 = inlined_call_operand.hbm [shape: f32[8,256], index: 2, kind: output, shape index: {}]
  %s3 = sld [smem:[#allocation0]]
  $region22: #{tpu_custom_call.1} parent=0
    _
  %s5 = ssub.s32 1, %s3
  %s6 = scalar_select 0, %s5, %s3
  $region1: #{tpu_custom_call.1} parent=0
    #allocation2 [shape = 'u8[8192]{0}', space=vmem, size = 0x2000, scoped, tag = 'input window, operand 0, single buffered']
    #allocation3 [shape = 's32[1]{0}', space=sflag, size = 0x4, scoped, tag = 'scoped memory for tpu_custom_call.1']
    #allocation4 [shape = 's32[1]{0}', space=sflag, size = 0x4, scoped, tag = 'scoped memory for tpu_custom_call.1']
    #allocation5 [shape = 'u8[8192]{0}', space=vmem, size = 0x2000, scoped, tag = 'output window, operand 0, single buffered']
    %7 = vsyncpa [#allocation3], 0
    %8 = vsyncpa [#allocation4], 0
    // Predicated region
    $region2: #{tpu_custom_call.1} parent=1 // pred_check
      _
    $region3: #{tpu_custom_call.1} parent=1 // pred_check_branch
      %10 = sbr.rel (0) target = $region5
    $region4: #{tpu_custom_call.1} parent=1 // pred_region
      %s12 = ssub.s32 256, 256
      %13 = vsyncadd [#allocation3], %s12
      %s15 = sshll.u32 [#allocation2], 4
      %s16 = int_to_ptr.vmem [resolvable:$true] %s15
      %18 = dma.hbm_to_vmem [thread:$0]  %s0, 256, %s16, [#allocation3]
    $region5: #{tpu_custom_call.1} parent=1 // pred_fallthru
      _
    // Predicated region
    $region6: #{tpu_custom_call.1} parent=1 // pred_check
      _
    $region7: #{tpu_custom_call.1} parent=1 // pred_check_branch
      %20 = sbr.rel (0) target = $region9
    $region8: #{tpu_custom_call.1} parent=1 // pred_region
      _
    $region9: #{tpu_custom_call.1} parent=1 // pred_fallthru
      _
    // Predicated region
    $region10: #{tpu_custom_call.1} parent=1 // pred_check
      _
    $region11: #{tpu_custom_call.1} parent=1 // pred_check_branch
      %22 = sbr.rel (0) target = $region13
    $region12: #{tpu_custom_call.1} parent=1 // pred_region
      %23 = dma.done [#allocation3], 256
    $region13: #{tpu_custom_call.1} parent=1 // pred_fallthru
      _
    %v24 = vld [vmem:[#allocation2] sm:$0xff]
    %v25 = vld [vmem:[#allocation2 + $0x8] sm:$0xff]
    %v26 = vadd.f32 %v24, %v25
    %27 = vadd.xlane.f32.xlu0 %v26
    %v28 = vpop.xlane.xlu0 %27
    %v29 = vmul.f32 %v24, %v24
    %v30 = vmul.f32 %v25, %v25
    %v31 = vadd.f32 %v29, %v30
    %32 = vadd.xlane.f32.xlu0 %v31
    %v33 = vpop.xlane.xlu0 %32
    %v34 = vmul.f32 %v28, 0.00390625
    %v35 = vmul.f32 %v28, %v34
    %v36 = vsub.f32 %v33, %v35
    %v37 = vrcp.pop 255.0
    %v38 = vmul.f32 %v36, %v37
    %v39 = vadd.f32 %v38, 1e-05
    %v40 = vrsqrt.pop %v39
    %v41 = vld [vmem:[%s1] sm:$0xff]
    %v42 = vmul.f32 %v40, %v41
    %v43 = vmul.f32 %v34, %v42
    %45 = vrot.lane.b32.xlu0 %v43, 1
    %v46 = vpop.permute.xlu0 %45
    %v48 = vsub.f32 %v41, %v46
    %50 = vset.pattern.permute.xlu0 0
    %51 = vperm.xlu0 %50, %v42
    %v52 = vpop.permute.xlu0 %51
    %v54 = vmul.f32 %v24, %v52
    %v55 = vmul.f32 %v25, %v52
    %57 = vset.pattern.permute.xlu0 1
    %58 = vperm.xlu0 %57, %v48
    %v59 = vpop.permute.xlu0 %58
    %v61 = vadd.f32 %v54, %v59
    %v62 = vadd.f32 %v55, %v59
    %63 = vst [vmem:[#allocation5] sm:$0xff] %v61
    %64 = vst [vmem:[#allocation5 + $0x8] sm:$0xff] %v62
    // Predicated region
    $region14: #{tpu_custom_call.1} parent=1 // pred_check
      _
    $region15: #{tpu_custom_call.1} parent=1 // pred_check_branch
      %66 = sbr.rel (0) target = $region17
    $region16: #{tpu_custom_call.1} parent=1 // pred_region
      %s68 = ssub.s32 256, 256
      %69 = vsyncadd [#allocation4], %s68
      %s71 = sshll.u32 [#allocation5], 4
      %s72 = int_to_ptr.vmem [resolvable:$true] %s71
      %74 = dma.vmem_to_hbm [thread:$0]  %s72, 256, %s2, [#allocation4]
    $region17: #{tpu_custom_call.1} parent=1 // pred_fallthru
      _
    // Predicated region
    $region18: #{tpu_custom_call.1} parent=1 // pred_check
      _
    $region19: #{tpu_custom_call.1} parent=1 // pred_check_branch
      %76 = sbr.rel (0) target = $region21
    $region20: #{tpu_custom_call.1} parent=1 // pred_region
      %77 = dma.done [#allocation4], 256
    $region21: #{tpu_custom_call.1} parent=1 // pred_fallthru
      _
    %78 = vsyncpa [#allocation3], 1
    %79 = vsyncpa [#allocation4], 1

</llo_original>
